<compile_context>
chip_gen: v7x
topology: tpu7x:2x2x1
jax: 0.10.0
libtpu: 0.0.40
codegen_flags: <defaults>
</compile_context>

<pallas_src>
import jax
import jax.numpy as jnp
from jax.experimental import pallas as pl
from jax.experimental.pallas import tpu as pltpu

_LANE = 128
_TARGET_BLOCK_BYTES = 2 * 1024 * 1024  # ~2 MiB blocks: safe on v5e scoped-VMEM default


def _trapezoid_kernel(params_ref, x_ref, o_ref):
    # params_ref (SMEM): [a, b, c, d] as float32 scalars (learnable params).
    a = params_ref[0]
    b = params_ref[1]
    c = params_ref[2]
    d = params_ref[3]

    # Hoist divisions off the vector path: two scalar reciprocals per block.
    inv_ab = 1.0 / jnp.where(b > a, b - a, jnp.float32(1.0))
    inv_cd = 1.0 / jnp.where(d > c, d - c, jnp.float32(1.0))

    x = x_ref[...]
    dt = x.dtype
    a_v = a.astype(dt)
    b_v = b.astype(dt)
    c_v = c.astype(dt)
    d_v = d.astype(dt)
    iab = inv_ab.astype(dt)
    icd = inv_cd.astype(dt)
    one = jnp.ones((), dt)

    y = jnp.zeros_like(x)
    # Scalar guards (a<b, b<c, c<d) of the PyTorch forward are implied by the
    # element-range masks below (each range is empty unless its guard holds),
    # so dropping them is exact for any parameter ordering.
    # Rising edge:  a <  x <= b  ->  (x - a) / (b - a)
    y = jnp.where((a_v < x) & (x <= b_v), (x - a_v) * iab, y)
    # Flat top:     b <  x <  c  ->  1
    y = jnp.where((b_v < x) & (x < c_v), one, y)
    # Falling edge: c <= x <  d  ->  (d - x) / (d - c)
    y = jnp.where((c_v <= x) & (x < d_v), (d_v - x) * icd, y)

    o_ref[...] = y


def trapezoidal_memb_func(x, a, b, c, d):
    """Elementwise trapezoidal membership function, matching the PyTorch forward."""
    orig_shape = x.shape
    # Membership is a float response; promote non-floating inputs to f32.
    # TODO(synk): PyTorch would keep the integer dtype here (and truncate); we
    # promote to float32 instead, which is the meaningful membership value.
    if not jnp.issubdtype(x.dtype, jnp.floating):
        x = x.astype(jnp.float32)
    dtype = x.dtype
    n = int(x.size)
    if n == 0:
        return jnp.zeros(orig_shape, dtype)

    params = jnp.array([a, b, c, d], dtype=jnp.float32)

    # Pick the widest lane width (multiple of 128, <= 1024) dividing n so that no
    # wrapper-side pad/slice HBM passes are needed.
    width = None
    for w in (1024, 512, 256, 128):
        if n % w == 0:
            width = w
            break

    padded = False
    if width is None:
        # Rare fallback for sizes not divisible by 128: minimal pad + final slice.
        width = _LANE
        n_pad = pl.cdiv(n, width) * width
        xf = jnp.pad(x.reshape(-1), (0, n_pad - n))
        padded = True
    else:
        n_pad = n
        xf = x.reshape(-1)

    rows = n_pad // width
    x2d = xf.reshape(rows, width)  # tall, lane-dense, contiguous slab

    itemsize = jnp.dtype(dtype).itemsize
    target_rows = max(8, (_TARGET_BLOCK_BYTES // (width * itemsize)) // 8 * 8)
    if rows <= 8:
        block_rows = rows  # single block covering the whole (tiny) array
    else:
        # >= 2 grid steps (v7x megacore) with blocks capped at ~2 MiB; the last
        # block may be partial -- Pallas masks its out-of-bounds writes.
        half = pl.cdiv(pl.cdiv(rows, 2), 8) * 8
        block_rows = min(target_rows, half)
    grid = (pl.cdiv(rows, block_rows),)

    out2d = pl.pallas_call(
        _trapezoid_kernel,
        out_shape=jax.ShapeDtypeStruct((rows, width), dtype),
        grid=grid,
        in_specs=[
            pl.BlockSpec(memory_space=pltpu.SMEM),                 # [a, b, c, d]
            pl.BlockSpec((block_rows, width), lambda i: (i, 0)),   # input tile
        ],
        out_specs=pl.BlockSpec((block_rows, width), lambda i: (i, 0)),
        compiler_params=pltpu.CompilerParams(
            dimension_semantics=("parallel",),
        ),
    )(params, x2d)

    out = out2d.reshape(-1)
    if padded:
        out = out[:n]
    return out.reshape(orig_shape)


def _reference(x, a, b, c, d):
    """Pure-JAX reference replicating the PyTorch forward semantics."""
    xf = x.astype(jnp.float32)
    y = jnp.zeros_like(xf)
    if a < b:
        y = jnp.where((a < xf) & (xf <= b), (xf - a) / (b - a), y)
    if b < c:
        y = jnp.where((b < xf) & (xf < c), jnp.float32(1.0), y)
    if c < d:
        y = jnp.where((c <= xf) & (xf < d), (d - xf) / (d - c), y)
    return y


if __name__ == "__main__":
    # Deterministic parameters (a <= b <= c <= d): symmetric trapezoid.
    a, b, c, d = -1.0, -0.25, 0.25, 1.0
    key = jax.random.PRNGKey(0)

    # Primary check: module-sized NCHW input (single-block path, no pad/slice).
    x = jax.random.uniform(key, (2, 4, 16, 16), dtype=jnp.float32,
                           minval=-1.5, maxval=1.5)
    out = jax.block_until_ready(trapezoidal_memb_func(x, a, b, c, d))
    ref = _reference(x, a, b, c, d)
    assert out.shape == x.shape and out.dtype == x.dtype
    assert jnp.allclose(out, ref, atol=1e-6), "f32 mismatch vs reference"

    # Multi-block path (grid of 2 contiguous ~1 MiB tiles -> both v7x TCs busy).
    k1, k2 = jax.random.split(key)
    xl = jax.random.uniform(k1, (4, 8, 128, 128), dtype=jnp.float32,
                            minval=-1.5, maxval=1.5)
    outl = jax.block_until_ready(trapezoidal_memb_func(xl, a, b, c, d))
    assert jnp.allclose(outl, _reference(xl, a, b, c, d), atol=1e-6), \
        "tiled f32 mismatch vs reference"

    # Native-dtype (bf16) path: no f32 upcast anywhere, full vreg packing.
    xb = jax.random.uniform(k2, (2, 4, 16, 16), minval=-1.5,
                            maxval=1.5).astype(jnp.bfloat16)
    outb = jax.block_until_ready(trapezoidal_memb_func(xb, a, b, c, d))
    assert outb.dtype == jnp.bfloat16
    refb = _reference(xb.astype(jnp.float32), a, b, c, d)
    assert jnp.allclose(outb.astype(jnp.float32), refb, atol=2e-2), \
        "bf16 mismatch vs reference"

    # Non-tile-aligned rows (partial last block, masked writes, still no pad).
    xo = jax.random.uniform(key, (3, 3, 1024), dtype=jnp.float32,
                            minval=-1.5, maxval=1.5)  # 9 rows of 1024
    outo = jax.block_until_ready(trapezoidal_memb_func(xo, a, b, c, d))
    assert jnp.allclose(outo, _reference(xo, a, b, c, d), atol=1e-6), \
        "partial-block f32 mismatch vs reference"

    print("KERNEL_OK")
</pallas_src>

<mosaic_0001>
module attributes {stable_mosaic.version = 11 : i64} {
  func.func @_trapezoid_kernel(%arg0: i32, %arg1: memref<4xf32, #tpu.memory_space<smem>>, %arg2: memref<2x1024xf32, #tpu.memory_space<vmem>>, %arg3: memref<2x1024xf32, #tpu.memory_space<vmem>>) attributes {dimension_semantics = [#tpu.dimension_semantics<parallel>], iteration_bounds = array<i64: 1>, scalar_prefetch = 0 : i64, scratch_operands = 0 : i64, tpu.core_type = #tpu.core_type<tc>, window_params = [{transform_indices = @transform_0, window_bounds = array<i64: 4>}, {transform_indices = @transform_1, window_bounds = array<i64: 2, 1024>}, {transform_indices = @transform_2, window_bounds = array<i64: 2, 1024>}]} {
    %c0 = arith.constant 0 : index
    %0 = memref.load %arg1[%c0] : memref<4xf32, #tpu.memory_space<smem>>
    %c1 = arith.constant 1 : index
    %1 = memref.load %arg1[%c1] : memref<4xf32, #tpu.memory_space<smem>>
    %c2 = arith.constant 2 : index
    %2 = memref.load %arg1[%c2] : memref<4xf32, #tpu.memory_space<smem>>
    %c3 = arith.constant 3 : index
    %3 = memref.load %arg1[%c3] : memref<4xf32, #tpu.memory_space<smem>>
    %4 = arith.cmpf ogt, %1, %0 : f32
    %5 = arith.subf %1, %0 : f32
    %cst = arith.constant 1.000000e+00 : f32
    %6 = arith.select %4, %5, %cst : f32
    %cst_0 = arith.constant 1.000000e+00 : f32
    %7 = arith.divf %cst_0, %6 : f32
    %8 = arith.cmpf ogt, %3, %2 : f32
    %9 = arith.subf %3, %2 : f32
    %cst_1 = arith.constant 1.000000e+00 : f32
    %10 = arith.select %8, %9, %cst_1 : f32
    %cst_2 = arith.constant 1.000000e+00 : f32
    %11 = arith.divf %cst_2, %10 : f32
    %c0_3 = arith.constant 0 : index
    %c0_4 = arith.constant 0 : index
    %12 = vector.load %arg2[%c0_3, %c0_4] : memref<2x1024xf32, #tpu.memory_space<vmem>>, vector<2x1024xf32>
    %cst_5 = arith.constant 0.000000e+00 : f32
    %13 = vector.broadcast %cst_5 : f32 to vector<2x1024xf32>
    %14 = vector.broadcast %0 : f32 to vector<2x1024xf32>
    %15 = arith.cmpf olt, %14, %12 : vector<2x1024xf32>
    %16 = vector.broadcast %1 : f32 to vector<2x1024xf32>
    %17 = arith.cmpf ole, %12, %16 : vector<2x1024xf32>
    %18 = arith.andi %15, %17 : vector<2x1024xi1>
    %19 = vector.broadcast %0 : f32 to vector<2x1024xf32>
    %20 = arith.subf %12, %19 : vector<2x1024xf32>
    %21 = vector.broadcast %7 : f32 to vector<2x1024xf32>
    %22 = arith.mulf %20, %21 : vector<2x1024xf32>
    %23 = arith.select %18, %22, %13 : vector<2x1024xi1>, vector<2x1024xf32>
    %24 = vector.broadcast %1 : f32 to vector<2x1024xf32>
    %25 = arith.cmpf olt, %24, %12 : vector<2x1024xf32>
    %26 = vector.broadcast %2 : f32 to vector<2x1024xf32>
    %27 = arith.cmpf olt, %12, %26 : vector<2x1024xf32>
    %28 = arith.andi %25, %27 : vector<2x1024xi1>
    %cst_6 = arith.constant 1.000000e+00 : f32
    %29 = vector.broadcast %cst_6 : f32 to vector<2x1024xf32>
    %30 = arith.select %28, %29, %23 : vector<2x1024xi1>, vector<2x1024xf32>
    %31 = vector.broadcast %2 : f32 to vector<2x1024xf32>
    %32 = arith.cmpf ole, %31, %12 : vector<2x1024xf32>
    %33 = vector.broadcast %3 : f32 to vector<2x1024xf32>
    %34 = arith.cmpf olt, %12, %33 : vector<2x1024xf32>
    %35 = arith.andi %32, %34 : vector<2x1024xi1>
    %36 = vector.broadcast %3 : f32 to vector<2x1024xf32>
    %37 = arith.subf %36, %12 : vector<2x1024xf32>
    %38 = vector.broadcast %11 : f32 to vector<2x1024xf32>
    %39 = arith.mulf %37, %38 : vector<2x1024xf32>
    %40 = arith.select %35, %39, %30 : vector<2x1024xi1>, vector<2x1024xf32>
    %c0_7 = arith.constant 0 : index
    %c0_8 = arith.constant 0 : index
    %41 = vector.load %arg3[%c0_7, %c0_8] : memref<2x1024xf32, #tpu.memory_space<vmem>>, vector<2x1024xf32>
    tpu.vector_store %arg3[%c0_7, %c0_8], %40 {strides = array<i32>} : memref<2x1024xf32, #tpu.memory_space<vmem>>, vector<2x1024xf32>,
    return
  }
  func.func @transform_0(%arg0: i32) -> i32 {
    %c0_i32 = arith.constant 0 : i32
    %c0_i32_0 = arith.constant 0 : i32
    return %c0_i32 : i32
  }
  func.func @transform_1(%arg0: i32) -> (i32, i32) {
    %c0_i32 = arith.constant 0 : i32
    %c0_i32_0 = arith.constant 0 : i32
    return %arg0, %c0_i32 : i32, i32
  }
  func.func @transform_2(%arg0: i32) -> (i32, i32) {
    %c0_i32 = arith.constant 0 : i32
    %c0_i32_0 = arith.constant 0 : i32
    return %arg0, %c0_i32 : i32, i32
  }
}

</mosaic_0001>

<llo_original>
// kernel: tpu_custom_call.1
$region0: #{tpu_custom_call.1}
  #allocation0 [shape = 'u32[]', space=smem, size = 0x4, offset = 0x4, fixed_abs, tag = 'smem constant byte address 0x4 - core index']
  #allocation1 [shape = 'u32[144,128]{1,0:T(1,128)}', space=vmem, size = 0x12000, scoped, tag = 'internal scratch']
  %s0 = inlined_call_operand.hbm [shape: f32[4], index: 0, kind: input, shape index: {}]
  %s1 = inlined_call_operand.hbm [shape: f32[2,1024], index: 1, kind: input, shape index: {}]
  %s2 = inlined_call_operand.hbm [shape: f32[2,1024], index: 2, kind: output, shape index: {}]
  %s3 = sld [smem:[#allocation0]]
  $region26: #{tpu_custom_call.1} parent=0
    _
  %s5 = ssub.s32 1, %s3
  %s6 = scalar_select 0, %s5, %s3
  $region1: #{tpu_custom_call.1} parent=0
    #allocation2 [shape = 'u8[512]{0}', space=smem, size = 0x200, scoped, tag = 'input window, operand 0, single buffered']
    #allocation3 [shape = 's32[1]{0}', space=sflag, size = 0x4, scoped, tag = 'scoped memory for tpu_custom_call.1']
    #allocation4 [shape = 's32[1]{0}', space=sflag, size = 0x4, scoped, tag = 'scoped memory for tpu_custom_call.1']
    #allocation5 [shape = 's32[1]{0}', space=sflag, size = 0x4, scoped, tag = 'scoped memory for tpu_custom_call.1']
    #allocation6 [shape = 'u8[8192]{0}', space=vmem, size = 0x2000, scoped, tag = 'input window, operand 1, single buffered']
    #allocation7 [shape = 'u8[8192]{0}', space=vmem, size = 0x2000, scoped, tag = 'output window, operand 0, single buffered']
    %7 = vsyncpa [#allocation5], 0
    %8 = vsyncpa [#allocation3], 0
    %9 = vsyncpa [#allocation4], 0
    // Predicated region
    $region2: #{tpu_custom_call.1} parent=1 // pred_check
      _
    $region3: #{tpu_custom_call.1} parent=1 // pred_check_branch
      %11 = sbr.rel (0) target = $region5
    $region4: #{tpu_custom_call.1} parent=1 // pred_region
      %s13 = ssub.s32 16, 16
      %14 = vsyncadd [#allocation5], %s13
      %17 = dma.hbm_to_smem %s0, 16, [#allocation2], [#allocation5]
    $region5: #{tpu_custom_call.1} parent=1 // pred_fallthru
      _
    // Predicated region
    $region6: #{tpu_custom_call.1} parent=1 // pred_check
      _
    $region7: #{tpu_custom_call.1} parent=1 // pred_check_branch
      %19 = sbr.rel (0) target = $region9
    $region8: #{tpu_custom_call.1} parent=1 // pred_region
      %s21 = ssub.s32 256, 256
      %22 = vsyncadd [#allocation3], %s21
      %s24 = sshll.u32 [#allocation6], 4
      %s25 = int_to_ptr.vmem [resolvable:$true] %s24
      %27 = dma.hbm_to_vmem [thread:$0]  %s1, 256, %s25, [#allocation3]
    $region9: #{tpu_custom_call.1} parent=1 // pred_fallthru
      _
    // Predicated region
    $region10: #{tpu_custom_call.1} parent=1 // pred_check
      _
    $region11: #{tpu_custom_call.1} parent=1 // pred_check_branch
      %29 = sbr.rel (0) target = $region13
    $region12: #{tpu_custom_call.1} parent=1 // pred_region
      %30 = dma.done [#allocation5], 16
    $region13: #{tpu_custom_call.1} parent=1 // pred_fallthru
      _
    // Predicated region
    $region14: #{tpu_custom_call.1} parent=1 // pred_check
      _
    $region15: #{tpu_custom_call.1} parent=1 // pred_check_branch
      %32 = sbr.rel (0) target = $region17
    $region16: #{tpu_custom_call.1} parent=1 // pred_region
      %33 = dma.done [#allocation3], 256
    $region17: #{tpu_custom_call.1} parent=1 // pred_fallthru
      _
    %34 = sfence
    %s35 = sld [smem:[#allocation2]]
    %s36 = sld [smem:[#allocation2 + $0x1]]
    %s37 = sld [smem:[#allocation2 + $0x2]]
    %s38 = sld [smem:[#allocation2 + $0x3]]
    %p39 = scmp.gt.f32.partialorder %s36, %s35
    %s40 = ssub.f32 %s36, %s35
    %s41 = scalar_select %p39, %s40, 1.0
    %v42 = vstv %s41
    %v43 = vrcp.pop %v42
    %s44 = vtos %v43
    %p45 = scmp.gt.f32.partialorder %s38, %s37
    %s46 = ssub.f32 %s38, %s37
    %s47 = scalar_select %p45, %s46, 1.0
    %v48 = vstv %s47
    %v49 = vrcp.pop %v48
    %s50 = vtos %v49
    %v51 = vld [vmem:[#allocation6] sm:$0xff]
    %v52 = vld [vmem:[#allocation6 + $0x8] sm:$0xff]
    %v53 = vstv %s35
    %vm54 = vcmp.lt.f32.partialorder %v53, %v51
    %vm55 = vcmp.lt.f32.partialorder %v53, %v52
    %v56 = vstv %s36
    %vm57 = vcmp.le.f32.partialorder %v51, %v56
    %vm58 = vcmp.le.f32.partialorder %v52, %v56
    %vm59 = vmand %vm54, %vm57
    %vm60 = vmand %vm55, %vm58
    %v61 = vsub.f32 %v51, %v53
    %v62 = vsub.f32 %v52, %v53
    %v63 = vstv %s44
    %v64 = vmul.f32 %v61, %v63
    %v65 = vmul.f32 %v62, %v63
    %v66 = vsel %vm59, %v64, 0.0
    %v67 = vsel %vm60, %v65, 0.0
    %vm68 = vcmp.lt.f32.partialorder %v56, %v51
    %vm69 = vcmp.lt.f32.partialorder %v56, %v52
    %v70 = vstv %s37
    %vm71 = vcmp.lt.f32.partialorder %v51, %v70
    %vm72 = vcmp.lt.f32.partialorder %v52, %v70
    %vm73 = vmand %vm68, %vm71
    %vm74 = vmand %vm69, %vm72
    %v75 = vsel %vm73, 1.0, %v66
    %v76 = vsel %vm74, 1.0, %v67
    %vm77 = vcmp.le.f32.partialorder %v70, %v51
    %vm78 = vcmp.le.f32.partialorder %v70, %v52
    %v79 = vstv %s38
    %vm80 = vcmp.lt.f32.partialorder %v51, %v79
    %vm81 = vcmp.lt.f32.partialorder %v52, %v79
    %vm82 = vmand %vm77, %vm80
    %vm83 = vmand %vm78, %vm81
    %v84 = vsub.f32 %v79, %v51
    %v85 = vsub.f32 %v79, %v52
    %v86 = vstv %s50
    %v87 = vmul.f32 %v84, %v86
    %v88 = vmul.f32 %v85, %v86
    %v89 = vsel %vm82, %v87, %v75
    %v90 = vsel %vm83, %v88, %v76
    %91 = vst [vmem:[#allocation7] sm:$0xff] %v89
    %92 = vst [vmem:[#allocation7 + $0x8] sm:$0xff] %v90
    // Predicated region
    $region18: #{tpu_custom_call.1} parent=1 // pred_check
      _
    $region19: #{tpu_custom_call.1} parent=1 // pred_check_branch
      %94 = sbr.rel (0) target = $region21
    $region20: #{tpu_custom_call.1} parent=1 // pred_region
      %s96 = ssub.s32 256, 256
      %97 = vsyncadd [#allocation4], %s96
      %s99 = sshll.u32 [#allocation7], 4
      %s100 = int_to_ptr.vmem [resolvable:$true] %s99
      %102 = dma.vmem_to_hbm [thread:$0]  %s100, 256, %s2, [#allocation4]
    $region21: #{tpu_custom_call.1} parent=1 // pred_fallthru
      _
    // Predicated region
    $region22: #{tpu_custom_call.1} parent=1 // pred_check
      _
    $region23: #{tpu_custom_call.1} parent=1 // pred_check_branch
      %104 = sbr.rel (0) target = $region25
    $region24: #{tpu_custom_call.1} parent=1 // pred_region
      %105 = dma.done [#allocation4], 256
    $region25: #{tpu_custom_call.1} parent=1 // pred_fallthru
      _
    %106 = vsyncpa [#allocation3], 1
    %107 = vsyncpa [#allocation4], 1
    %108 = vsyncpa [#allocation5], 1

</llo_original>
